<compile_context>
chip_gen: v5e
topology: v5e:2x2
jax: 0.10.0
libtpu: 0.0.40
codegen_flags: <defaults>
</compile_context>

<pallas_src>
import jax
import jax.numpy as jnp
from jax.experimental import pallas as pl
from jax.experimental.pallas import tpu as pltpu


def _round_up(x, m):
    return ((x + m - 1) // m) * m


def _fcnet_kernel(x_ref, w1_ref, b1_ref, w2_ref, b2_ref, o_ref):
    # fc1: (TB, Kp) bf16 @ (Kp, 256) bf16 -> f32 accumulate on the MXU.
    h = jnp.dot(x_ref[...], w1_ref[...], preferred_element_type=jnp.float32)
    # bias + ReLU in f32 on the VPU (v5e has no bf16 VALU).
    h = jnp.maximum(h + b1_ref[...], 0.0)
    # fc2: feed MXU in bf16 again, accumulate f32. Output is lane-dense (128).
    out = jnp.dot(h.astype(w2_ref.dtype), w2_ref[...],
                  preferred_element_type=jnp.float32)
    o_ref[...] = (out + b2_ref[...]).astype(o_ref.dtype)


def fcnet_forward(x, w1, b1, w2, b2, *, tb=256):
    """x: (B, 1, 28, 28) or (B, 784) float32. Returns (B, 10) float32.

    w1: (784, 256), b1: (256,), w2: (256, 10), b2: (10,)  -- the (in, out)
    transpose of the PyTorch nn.Linear weights, so the kernel does x @ W.
    """
    B = x.shape[0]
    x2d = x.reshape(B, -1).astype(jnp.float32)     # same as torch .view(B, -1)
    in_feat, hid = w1.shape                        # (784, 256)
    _, out_feat = w2.shape                         # (256, 10)
    assert x2d.shape[1] == in_feat

    # Lane-dense padding: K 784 -> 896, output 10 -> 128.
    Kp = _round_up(in_feat, 128)                   # 896
    Np = _round_up(out_feat, 128)                  # 128

    # Batch tile: multiple of 8 (f32 sublane); cap at `tb` (default 256, which
    # matches the v6e/v7x 256-wide MXU and keeps VMEM usage tiny).
    TB = min(tb, _round_up(B, 8))
    Bp = _round_up(B, TB)

    # Pad / cast operands (in production you'd do the weight padding at init).
    x_p = jnp.zeros((Bp, Kp), jnp.bfloat16).at[:B, :in_feat].set(
        x2d.astype(jnp.bfloat16))
    w1_p = jnp.zeros((Kp, hid), jnp.bfloat16).at[:in_feat, :].set(
        w1.astype(jnp.bfloat16))
    b1_p = b1.reshape(1, hid).astype(jnp.float32)
    w2_p = jnp.zeros((hid, Np), jnp.bfloat16).at[:, :out_feat].set(
        w2.astype(jnp.bfloat16))
    b2_p = jnp.zeros((1, Np), jnp.float32).at[:, :out_feat].set(
        b2.astype(jnp.float32))

    grid = (Bp // TB,)
    cost = pl.CostEstimate(
        flops=2 * Bp * (Kp * hid + hid * Np),
        bytes_accessed=(x_p.size * 2 + w1_p.size * 2 + w2_p.size * 2
                        + b1_p.size * 4 + b2_p.size * 4 + Bp * Np * 4),
        transcendentals=0,
    )

    out_p = pl.pallas_call(
        _fcnet_kernel,
        out_shape=jax.ShapeDtypeStruct((Bp, Np), jnp.float32),
        grid_spec=pltpu.PrefetchScalarGridSpec(
            num_scalar_prefetch=0,
            grid=grid,
            in_specs=[
                pl.BlockSpec((TB, Kp), lambda i: (i, 0)),      # x tile per step
                pl.BlockSpec((Kp, hid), lambda i: (0, 0)),     # w1 resident
                pl.BlockSpec((1, hid), lambda i: (0, 0)),      # b1 resident
                pl.BlockSpec((hid, Np), lambda i: (0, 0)),     # w2 resident
                pl.BlockSpec((1, Np), lambda i: (0, 0)),       # b2 resident
            ],
            out_specs=pl.BlockSpec((TB, Np), lambda i: (i, 0)),
        ),
        compiler_params=pltpu.CompilerParams(
            dimension_semantics=("parallel",)),                # v7x: 2 TCs
        cost_estimate=cost,
    )(x_p, w1_p, b1_p, w2_p, b2_p)

    # Slice away batch + lane padding.
    return out_p[:B, :out_feat]


def _init_params(key):
    """Deterministic params matching nn.Linear(784,256) and nn.Linear(256,10).
    (PyTorch stores weight as (out, in); we keep the (in, out) transpose so the
    kernel does x @ W, which is numerically identical to x @ weight.T.)"""
    k1, k2, k3, k4 = jax.random.split(key, 4)
    bound1 = 1.0 / jnp.sqrt(784.0)
    bound2 = 1.0 / jnp.sqrt(256.0)
    w1 = jax.random.uniform(k1, (784, 256), jnp.float32, -bound1, bound1)
    b1 = jax.random.uniform(k2, (256,), jnp.float32, -bound1, bound1)
    w2 = jax.random.uniform(k3, (256, 10), jnp.float32, -bound2, bound2)
    b2 = jax.random.uniform(k4, (10,), jnp.float32, -bound2, bound2)
    return w1, b1, w2, b2


def _bf16_reference(x, w1, b1, w2, b2):
    """Plain-JAX reference with the same bf16-input / f32-accumulate recipe."""
    x2d = x.reshape(x.shape[0], -1)
    h = jnp.dot(x2d.astype(jnp.bfloat16), w1.astype(jnp.bfloat16),
                preferred_element_type=jnp.float32)
    h = jnp.maximum(h + b1, 0.0)
    out = jnp.dot(h.astype(jnp.bfloat16), w2.astype(jnp.bfloat16),
                  preferred_element_type=jnp.float32)
    return out + b2


if __name__ == "__main__":
    key = jax.random.PRNGKey(0)
    kx, kp, kx2 = jax.random.split(key, 3)

    w1, b1, w2, b2 = _init_params(kp)

    # Small MNIST-like batch: (B=8, C=1, H=28, W=28) -> flatten yields 784.
    x = jax.random.normal(kx, (8, 1, 28, 28), jnp.float32)
    out = fcnet_forward(x, w1, b1, w2, b2)
    jax.block_until_ready(out)
    assert out.shape == (8, 10)

    ref = _bf16_reference(x, w1, b1, w2, b2)
    assert jnp.allclose(out, ref, atol=1e-2, rtol=1e-2)
    # Sanity vs. full-f32 math (looser tolerance because of bf16 operands).
    ref_f32 = jnp.maximum(x.reshape(8, -1) @ w1 + b1, 0.0) @ w2 + b2
    assert jnp.allclose(out, ref_f32, atol=6e-2, rtol=6e-2)

    # Second shape: batch not a multiple of the tile, exercising the padding
    # and slicing path.
    x2 = jax.random.normal(kx2, (20, 1, 28, 28), jnp.float32)
    out2 = fcnet_forward(x2, w1, b1, w2, b2)
    jax.block_until_ready(out2)
    assert out2.shape == (20, 10)
    ref2 = _bf16_reference(x2, w1, b1, w2, b2)
    assert jnp.allclose(out2, ref2, atol=1e-2, rtol=1e-2)

    print("KERNEL_OK")
</pallas_src>

<mosaic_0001>
module attributes {stable_mosaic.version = 11 : i64} {
  func.func @_fcnet_kernel(%arg0: i32, %arg1: memref<8x896xbf16, #tpu.memory_space<vmem>>, %arg2: memref<896x256xbf16, #tpu.memory_space<vmem>>, %arg3: memref<1x256xf32, #tpu.memory_space<vmem>>, %arg4: memref<256x128xbf16, #tpu.memory_space<vmem>>, %arg5: memref<1x128xf32, #tpu.memory_space<vmem>>, %arg6: memref<8x128xf32, #tpu.memory_space<vmem>>) attributes {dimension_semantics = [#tpu.dimension_semantics<parallel>], iteration_bounds = array<i64: 1>, scalar_prefetch = 0 : i64, scratch_operands = 0 : i64, tpu.core_type = #tpu.core_type<tc>, window_params = [{transform_indices = @transform_0, window_bounds = array<i64: 8, 896>}, {pipeline_mode = #tpu.pipeline_mode<synchronous>, transform_indices = @transform_1, window_bounds = array<i64: 896, 256>}, {pipeline_mode = #tpu.pipeline_mode<synchronous>, transform_indices = @transform_2, window_bounds = array<i64: 1, 256>}, {pipeline_mode = #tpu.pipeline_mode<synchronous>, transform_indices = @transform_3, window_bounds = array<i64: 256, 128>}, {pipeline_mode = #tpu.pipeline_mode<synchronous>, transform_indices = @transform_4, window_bounds = array<i64: 1, 128>}, {transform_indices = @transform_5, window_bounds = array<i64: 8, 128>}]} {
    %c0 = arith.constant 0 : index
    %c0_0 = arith.constant 0 : index
    %0 = vector.load %arg1[%c0, %c0_0] : memref<8x896xbf16, #tpu.memory_space<vmem>>, vector<8x896xbf16>
    %c0_1 = arith.constant 0 : index
    %c0_2 = arith.constant 0 : index
    %1 = vector.load %arg2[%c0_1, %c0_2] : memref<896x256xbf16, #tpu.memory_space<vmem>>, vector<896x256xbf16>
    %cst = arith.constant dense<0.000000e+00> : vector<8x256xf32>
    %2 = tpu.matmul %0, %1, %cst {dimension_numbers = #tpu.dot_dimension_numbers<[1], [0], [0], [1], [0, 0, 1, 1], [], []>} : vector<8x896xbf16>, vector<896x256xbf16>, vector<8x256xf32> -> vector<8x256xf32>
    %c0_3 = arith.constant 0 : index
    %c0_4 = arith.constant 0 : index
    %3 = vector.load %arg3[%c0_3, %c0_4] : memref<1x256xf32, #tpu.memory_space<vmem>>, vector<1x256xf32>
    %4 = vector.broadcast %3 : vector<1x256xf32> to vector<8x256xf32>
    %5 = arith.addf %2, %4 : vector<8x256xf32>
    %cst_5 = arith.constant 0.000000e+00 : f32
    %6 = vector.broadcast %cst_5 : f32 to vector<8x256xf32>
    %7 = arith.maximumf %5, %6 : vector<8x256xf32>
    %8 = arith.truncf %7 : vector<8x256xf32> to vector<8x256xbf16>
    %c0_6 = arith.constant 0 : index
    %c0_7 = arith.constant 0 : index
    %9 = vector.load %arg4[%c0_6, %c0_7] : memref<256x128xbf16, #tpu.memory_space<vmem>>, vector<256x128xbf16>
    %cst_8 = arith.constant dense<0.000000e+00> : vector<8x128xf32>
    %10 = tpu.matmul %8, %9, %cst_8 {dimension_numbers = #tpu.dot_dimension_numbers<[1], [0], [0], [1], [0, 0, 1, 1], [], []>} : vector<8x256xbf16>, vector<256x128xbf16>, vector<8x128xf32> -> vector<8x128xf32>
    %c0_9 = arith.constant 0 : index
    %c0_10 = arith.constant 0 : index
    %11 = vector.load %arg5[%c0_9, %c0_10] : memref<1x128xf32, #tpu.memory_space<vmem>>, vector<1x128xf32>
    %12 = vector.broadcast %11 : vector<1x128xf32> to vector<8x128xf32>
    %13 = arith.addf %10, %12 : vector<8x128xf32>
    %c0_11 = arith.constant 0 : index
    %c0_12 = arith.constant 0 : index
    %14 = vector.load %arg6[%c0_11, %c0_12] : memref<8x128xf32, #tpu.memory_space<vmem>>, vector<8x128xf32>
    tpu.vector_store %arg6[%c0_11, %c0_12], %13 {strides = array<i32>} : memref<8x128xf32, #tpu.memory_space<vmem>>, vector<8x128xf32>,
    return
  }
  func.func @transform_0(%arg0: i32) -> (i32, i32) {
    %c0_i32 = arith.constant 0 : i32
    %c0_i32_0 = arith.constant 0 : i32
    return %arg0, %c0_i32 : i32, i32
  }
  func.func @transform_1(%arg0: i32) -> (i32, i32) {
    %c0_i32 = arith.constant 0 : i32
    %c0_i32_0 = arith.constant 0 : i32
    %c0_i32_1 = arith.constant 0 : i32
    return %c0_i32, %c0_i32_0 : i32, i32
  }
  func.func @transform_2(%arg0: i32) -> (i32, i32) {
    %c0_i32 = arith.constant 0 : i32
    %c0_i32_0 = arith.constant 0 : i32
    %c0_i32_1 = arith.constant 0 : i32
    return %c0_i32, %c0_i32_0 : i32, i32
  }
  func.func @transform_3(%arg0: i32) -> (i32, i32) {
    %c0_i32 = arith.constant 0 : i32
    %c0_i32_0 = arith.constant 0 : i32
    %c0_i32_1 = arith.constant 0 : i32
    return %c0_i32, %c0_i32_0 : i32, i32
  }
  func.func @transform_4(%arg0: i32) -> (i32, i32) {
    %c0_i32 = arith.constant 0 : i32
    %c0_i32_0 = arith.constant 0 : i32
    %c0_i32_1 = arith.constant 0 : i32
    return %c0_i32, %c0_i32_0 : i32, i32
  }
  func.func @transform_5(%arg0: i32) -> (i32, i32) {
    %c0_i32 = arith.constant 0 : i32
    %c0_i32_0 = arith.constant 0 : i32
    return %arg0, %c0_i32 : i32, i32
  }
}

</mosaic_0001>

<llo_original>
// kernel: tpu_custom_call.1
$region0: #{tpu_custom_call.1}
  #allocation0 [shape = 'u32[]', space=smem, size = 0x4, offset = 0x4, fixed_abs, tag = 'smem constant byte address 0x4 - core index']
  #allocation1 [shape = 'u32[72,128]{1,0:T(1,128)}', space=vmem, size = 0x9000, scoped, tag = 'internal scratch']
  %s0 = inlined_call_operand.hbm [shape: bf16[8,896], index: 0, kind: input, shape index: {}]
  %s1 = inlined_call_operand.hbm [shape: bf16[896,256], index: 1, kind: input, shape index: {}]
  %s2 = inlined_call_operand.hbm [shape: f32[1,256], index: 2, kind: input, shape index: {}]
  %s3 = inlined_call_operand.hbm [shape: bf16[256,128], index: 3, kind: input, shape index: {}]
  %s4 = inlined_call_operand.vmem [shape: f32[1,128], index: 4, kind: input, shape index: {}]
  %s5 = inlined_call_operand.hbm [shape: f32[8,128], index: 5, kind: output, shape index: {}]
  %s6 = sld [smem:[#allocation0]]
  $region46: #{tpu_custom_call.1} parent=0
    _
  %s8 = ssub.s32 1, %s6
  %s9 = scalar_select 0, %s8, %s6
  $region1: #{tpu_custom_call.1} parent=0
    #allocation2 [shape = 'u8[14336]{0}', space=vmem, size = 0x3800, scoped, tag = 'input window, operand 0, single buffered']
    #allocation3 [shape = 's32[1]{0}', space=sflag, size = 0x4, scoped, tag = 'scoped memory for tpu_custom_call.1']
    #allocation4 [shape = 's32[1]{0}', space=sflag, size = 0x4, scoped, tag = 'scoped memory for tpu_custom_call.1']
    #allocation5 [shape = 'u8[458752]{0}', space=vmem, size = 0x70000, scoped, tag = 'input window, operand 1, single buffered']
    #allocation6 [shape = 's32[1]{0}', space=sflag, size = 0x4, scoped, tag = 'scoped memory for tpu_custom_call.1']
    #allocation7 [shape = 'u8[1024]{0}', space=vmem, size = 0x400, scoped, tag = 'input window, operand 2, single buffered']
    #allocation8 [shape = 'u8[65536]{0}', space=vmem, size = 0x10000, scoped, tag = 'input window, operand 3, single buffered']
    #allocation9 [shape = 's32[1]{0}', space=sflag, size = 0x4, scoped, tag = 'scoped memory for tpu_custom_call.1']
    #allocation10 [shape = 'u8[4096]{0}', space=vmem, size = 0x1000, scoped, tag = 'output window, operand 0, single buffered']
    %10 = vsyncpa [#allocation3], 0
    %11 = vsyncpa [#allocation6], 0
    %12 = vsyncpa [#allocation9], 0
    %13 = vsyncpa [#allocation4], 0
    // Predicated region
    $region2: #{tpu_custom_call.1} parent=1 // pred_check
      _
    $region3: #{tpu_custom_call.1} parent=1 // pred_check_branch
      %15 = sbr.rel (0) target = $region5
    $region4: #{tpu_custom_call.1} parent=1 // pred_region
      %17 = vsyncadd [#allocation3], 0
      %s19 = sshll.u32 %s0, 4
      %s20 = int_to_ptr.hbm [resolvable:$true] %s19
      %s21 = sshll.u32 [#allocation2], 4
      %s22 = int_to_ptr.vmem [resolvable:$true] %s21
      %24 = dma.hbm_to_vmem [thread:$0]  %s20, 448, %s22, [#allocation3]
    $region5: #{tpu_custom_call.1} parent=1 // pred_fallthru
      _
    // Predicated region
    $region6: #{tpu_custom_call.1} parent=1 // pred_check
      _
    $region7: #{tpu_custom_call.1} parent=1 // pred_check_branch
      %26 = sbr.rel (0) target = $region9
    $region8: #{tpu_custom_call.1} parent=1 // pred_region
      %28 = vsyncadd [#allocation6], 0
      %s29 = sshll.u32 %s1, 4
      %s30 = int_to_ptr.hbm [resolvable:$true] %s29
      %s31 = sshll.u32 [#allocation5], 4
      %s32 = int_to_ptr.vmem [resolvable:$true] %s31
      %37 = dma.hbm_to_vmem [thread:$0]  %s30, 14336, %s32, [#allocation6], 128, 128, 8
    $region9: #{tpu_custom_call.1} parent=1 // pred_fallthru
      _
    // Predicated region
    $region10: #{tpu_custom_call.1} parent=1 // pred_check
      _
    $region11: #{tpu_custom_call.1} parent=1 // pred_check_branch
      %39 = sbr.rel (0) target = $region13
    $region12: #{tpu_custom_call.1} parent=1 // pred_region
      %41 = vsyncadd [#allocation6], 0
      %s43 = sshll.u32 %s2, 4
      %s44 = int_to_ptr.hbm [resolvable:$true] %s43
      %s45 = sshll.u32 [#allocation7], 4
      %s46 = int_to_ptr.vmem [resolvable:$true] %s45
      %48 = dma.hbm_to_vmem [thread:$0]  %s44, 32, %s46, [#allocation6]
    $region13: #{tpu_custom_call.1} parent=1 // pred_fallthru
      _
    // Predicated region
    $region14: #{tpu_custom_call.1} parent=1 // pred_check
      _
    $region15: #{tpu_custom_call.1} parent=1 // pred_check_branch
      %50 = sbr.rel (0) target = $region17
    $region16: #{tpu_custom_call.1} parent=1 // pred_region
      %52 = vsyncadd [#allocation9], 0
      %s53 = sshll.u32 %s3, 4
      %s54 = int_to_ptr.hbm [resolvable:$true] %s53
      %s55 = sshll.u32 [#allocation8], 4
      %s56 = int_to_ptr.vmem [resolvable:$true] %s55
      %61 = dma.hbm_to_vmem [thread:$0]  %s54, 2048, %s56, [#allocation9], 64, 64, 4
    $region17: #{tpu_custom_call.1} parent=1 // pred_fallthru
      _
    // Predicated region
    $region18: #{tpu_custom_call.1} parent=1 // pred_check
      _
    $region19: #{tpu_custom_call.1} parent=1 // pred_check_branch
      %63 = sbr.rel (0) target = $region21
    $region20: #{tpu_custom_call.1} parent=1 // pred_region
      _
    $region21: #{tpu_custom_call.1} parent=1 // pred_fallthru
      _
    // Predicated region
    $region22: #{tpu_custom_call.1} parent=1 // pred_check
      _
    $region23: #{tpu_custom_call.1} parent=1 // pred_check_branch
      %65 = sbr.rel (0) target = $region25
    $region24: #{tpu_custom_call.1} parent=1 // pred_region
      %67 = dma.done [#allocation3], 448
    $region25: #{tpu_custom_call.1} parent=1 // pred_fallthru
      _
    // Predicated region
    $region26: #{tpu_custom_call.1} parent=1 // pred_check
      _
    $region27: #{tpu_custom_call.1} parent=1 // pred_check_branch
      %69 = sbr.rel (0) target = $region29
    $region28: #{tpu_custom_call.1} parent=1 // pred_region
      %71 = dma.done [#allocation6], 14336
    $region29: #{tpu_custom_call.1} parent=1 // pred_fallthru
      _
    // Predicated region
    $region30: #{tpu_custom_call.1} parent=1 // pred_check
      _
    $region31: #{tpu_custom_call.1} parent=1 // pred_check_branch
      %73 = sbr.rel (0) target = $region33
    $region32: #{tpu_custom_call.1} parent=1 // pred_region
      %75 = dma.done [#allocation6], 32
    $region33: #{tpu_custom_call.1} parent=1 // pred_fallthru
      _
    // Predicated region
    $region34: #{tpu_custom_call.1} parent=1 // pred_check
      _
    $region35: #{tpu_custom_call.1} parent=1 // pred_check_branch
      %77 = sbr.rel (0) target = $region37
    $region36: #{tpu_custom_call.1} parent=1 // pred_region
      %79 = dma.done [#allocation9], 2048
    $region37: #{tpu_custom_call.1} parent=1 // pred_fallthru
      _
    %v80 = vld [vmem:[#allocation2] sm:$0xff]
    %v81 = vld [vmem:[#allocation2 + $0x8] sm:$0xff]
    %v82 = vld [vmem:[#allocation2 + $0x10] sm:$0xff]
    %v83 = vld [vmem:[#allocation2 + $0x18] sm:$0xf]
    %v84 = vld [vmem:[#allocation5] sm:$0xff]
    %v85 = vld [vmem:[#allocation5 + $0x8] sm:$0xff]
    %v86 = vld [vmem:[#allocation5 + $0x10] sm:$0xff]
    %v87 = vld [vmem:[#allocation5 + $0x18] sm:$0xff]
    %v88 = vld [vmem:[#allocation5 + $0x20] sm:$0xff]
    %v89 = vld [vmem:[#allocation5 + $0x28] sm:$0xff]
    %v90 = vld [vmem:[#allocation5 + $0x30] sm:$0xff]
    %v91 = vld [vmem:[#allocation5 + $0x38] sm:$0xff]
    %v92 = vld [vmem:[#allocation5 + $0x40] sm:$0xff]
    %v93 = vld [vmem:[#allocation5 + $0x48] sm:$0xff]
    %v94 = vld [vmem:[#allocation5 + $0x50] sm:$0xff]
    %v95 = vld [vmem:[#allocation5 + $0x58] sm:$0xff]
    %v96 = vld [vmem:[#allocation5 + $0x60] sm:$0xff]
    %v97 = vld [vmem:[#allocation5 + $0x68] sm:$0xff]
    %v98 = vld [vmem:[#allocation5 + $0x70] sm:$0xff]
    %v99 = vld [vmem:[#allocation5 + $0x78] sm:$0xff]
    %v100 = vld [vmem:[#allocation5 + $0x80] sm:$0xff]
    %v101 = vld [vmem:[#allocation5 + $0x88] sm:$0xff]
    %v102 = vld [vmem:[#allocation5 + $0x90] sm:$0xff]
    %v103 = vld [vmem:[#allocation5 + $0x98] sm:$0xff]
    %v104 = vld [vmem:[#allocation5 + $0xa0] sm:$0xff]
    %v105 = vld [vmem:[#allocation5 + $0xa8] sm:$0xff]
    %v106 = vld [vmem:[#allocation5 + $0xb0] sm:$0xff]
    %v107 = vld [vmem:[#allocation5 + $0xb8] sm:$0xff]
    %v108 = vld [vmem:[#allocation5 + $0xc0] sm:$0xff]
    %v109 = vld [vmem:[#allocation5 + $0xc8] sm:$0xff]
    %v110 = vld [vmem:[#allocation5 + $0xd0] sm:$0xff]
    %v111 = vld [vmem:[#allocation5 + $0xd8] sm:$0xff]
    %v112 = vld [vmem:[#allocation5 + $0xe0] sm:$0xff]
    %v113 = vld [vmem:[#allocation5 + $0xe8] sm:$0xff]
    %v114 = vld [vmem:[#allocation5 + $0xf0] sm:$0xff]
    %v115 = vld [vmem:[#allocation5 + $0xf8] sm:$0xff]
    %v116 = vld [vmem:[#allocation5 + $0x100] sm:$0xff]
    %v117 = vld [vmem:[#allocation5 + $0x108] sm:$0xff]
    %v118 = vld [vmem:[#allocation5 + $0x110] sm:$0xff]
    %v119 = vld [vmem:[#allocation5 + $0x118] sm:$0xff]
    %v120 = vld [vmem:[#allocation5 + $0x120] sm:$0xff]
    %v121 = vld [vmem:[#allocation5 + $0x128] sm:$0xff]
    %v122 = vld [vmem:[#allocation5 + $0x130] sm:$0xff]
    %v123 = vld [vmem:[#allocation5 + $0x138] sm:$0xff]
    %v124 = vld [vmem:[#allocation5 + $0x140] sm:$0xff]
    %v125 = vld [vmem:[#allocation5 + $0x148] sm:$0xff]
    %v126 = vld [vmem:[#allocation5 + $0x150] sm:$0xff]
    %v127 = vld [vmem:[#allocation5 + $0x158] sm:$0xff]
    %v128 = vld [vmem:[#allocation5 + $0x160] sm:$0xff]
    %v129 = vld [vmem:[#allocation5 + $0x168] sm:$0xff]
    %v130 = vld [vmem:[#allocation5 + $0x170] sm:$0xff]
    %v131 = vld [vmem:[#allocation5 + $0x178] sm:$0xff]
    %v132 = vld [vmem:[#allocation5 + $0x180] sm:$0xff]
    %v133 = vld [vmem:[#allocation5 + $0x188] sm:$0xff]
    %v134 = vld [vmem:[#allocation5 + $0x190] sm:$0xff]
    %v135 = vld [vmem:[#allocation5 + $0x198] sm:$0xff]
    %v136 = vld [vmem:[#allocation5 + $0x1a0] sm:$0xff]
    %v137 = vld [vmem:[#allocation5 + $0x1a8] sm:$0xff]
    %v138 = vld [vmem:[#allocation5 + $0x1b0] sm:$0xff]
    %v139 = vld [vmem:[#allocation5 + $0x1b8] sm:$0xff]
    %v140 = vld [vmem:[#allocation5 + $0x1c0] sm:$0xff]
    %v141 = vld [vmem:[#allocation5 + $0x1c8] sm:$0xff]
    %v142 = vld [vmem:[#allocation5 + $0x1d0] sm:$0xff]
    %v143 = vld [vmem:[#allocation5 + $0x1d8] sm:$0xff]
    %v144 = vld [vmem:[#allocation5 + $0x1e0] sm:$0xff]
    %v145 = vld [vmem:[#allocation5 + $0x1e8] sm:$0xff]
    %v146 = vld [vmem:[#allocation5 + $0x1f0] sm:$0xff]
    %v147 = vld [vmem:[#allocation5 + $0x1f8] sm:$0xff]
    %v148 = vld [vmem:[#allocation5 + $0x200] sm:$0xff]
    %v149 = vld [vmem:[#allocation5 + $0x208] sm:$0xff]
    %v150 = vld [vmem:[#allocation5 + $0x210] sm:$0xff]
    %v151 = vld [vmem:[#allocation5 + $0x218] sm:$0xff]
    %v152 = vld [vmem:[#allocation5 + $0x220] sm:$0xff]
    %v153 = vld [vmem:[#allocation5 + $0x228] sm:$0xff]
    %v154 = vld [vmem:[#allocation5 + $0x230] sm:$0xff]
    %v155 = vld [vmem:[#allocation5 + $0x238] sm:$0xff]
    %v156 = vld [vmem:[#allocation5 + $0x240] sm:$0xff]
    %v157 = vld [vmem:[#allocation5 + $0x248] sm:$0xff]
    %v158 = vld [vmem:[#allocation5 + $0x250] sm:$0xff]
    %v159 = vld [vmem:[#allocation5 + $0x258] sm:$0xff]
    %v160 = vld [vmem:[#allocation5 + $0x260] sm:$0xff]
    %v161 = vld [vmem:[#allocation5 + $0x268] sm:$0xff]
    %v162 = vld [vmem:[#allocation5 + $0x270] sm:$0xff]
    %v163 = vld [vmem:[#allocation5 + $0x278] sm:$0xff]
    %v164 = vld [vmem:[#allocation5 + $0x280] sm:$0xff]
    %v165 = vld [vmem:[#allocation5 + $0x288] sm:$0xff]
    %v166 = vld [vmem:[#allocation5 + $0x290] sm:$0xff]
    %v167 = vld [vmem:[#allocation5 + $0x298] sm:$0xff]
    %v168 = vld [vmem:[#allocation5 + $0x2a0] sm:$0xff]
    %v169 = vld [vmem:[#allocation5 + $0x2a8] sm:$0xff]
    %v170 = vld [vmem:[#allocation5 + $0x2b0] sm:$0xff]
    %v171 = vld [vmem:[#allocation5 + $0x2b8] sm:$0xff]
    %v172 = vld [vmem:[#allocation5 + $0x2c0] sm:$0xff]
    %v173 = vld [vmem:[#allocation5 + $0x2c8] sm:$0xff]
    %v174 = vld [vmem:[#allocation5 + $0x2d0] sm:$0xff]
    %v175 = vld [vmem:[#allocation5 + $0x2d8] sm:$0xff]
    %v176 = vld [vmem:[#allocation5 + $0x2e0] sm:$0xff]
    %v177 = vld [vmem:[#allocation5 + $0x2e8] sm:$0xff]
    %v178 = vld [vmem:[#allocation5 + $0x2f0] sm:$0xff]
    %v179 = vld [vmem:[#allocation5 + $0x2f8] sm:$0xff]
    %v180 = vld [vmem:[#allocation5 + $0x300] sm:$0xff]
    %v181 = vld [vmem:[#allocation5 + $0x308] sm:$0xff]
    %v182 = vld [vmem:[#allocation5 + $0x310] sm:$0xff]
    %v183 = vld [vmem:[#allocation5 + $0x318] sm:$0xff]
    %v184 = vld [vmem:[#allocation5 + $0x320] sm:$0xff]
    %v185 = vld [vmem:[#allocation5 + $0x328] sm:$0xff]
    %v186 = vld [vmem:[#allocation5 + $0x330] sm:$0xff]
    %v187 = vld [vmem:[#allocation5 + $0x338] sm:$0xff]
    %v188 = vld [vmem:[#allocation5 + $0x340] sm:$0xff]
    %v189 = vld [vmem:[#allocation5 + $0x348] sm:$0xff]
    %v190 = vld [vmem:[#allocation5 + $0x350] sm:$0xff]
    %v191 = vld [vmem:[#allocation5 + $0x358] sm:$0xff]
    %v192 = vld [vmem:[#allocation5 + $0x360] sm:$0xff]
    %v193 = vld [vmem:[#allocation5 + $0x368] sm:$0xff]
    %v194 = vld [vmem:[#allocation5 + $0x370] sm:$0xff]
    %v195 = vld [vmem:[#allocation5 + $0x378] sm:$0xff]
    %v196 = vld [vmem:[#allocation7] sm:$0x3]
    %v198 = vperm.slane %v196, 0
    %v199 = vperm.slane %v196, 1
    %v206 = vunpack.c.l.b16 %v80
    %v207 = vunpack.c.h.b16 %v80
    %v208 = vunpack.c.l.b16 %v81
    %v209 = vunpack.c.h.b16 %v81
    %v210 = vunpack.c.l.b16 %v82
    %v211 = vunpack.c.h.b16 %v82
    %v212 = vunpack.c.l.b16 %v83
    %v213 = vpack.c.b16 %v206, %v206
    %v214 = vpack.c.b16 %v207, %v207
    %v215 = vpack.c.b16 %v208, %v208
    %v216 = vpack.c.b16 %v209, %v209
    %v217 = vpack.c.b16 %v210, %v210
    %v218 = vpack.c.b16 %v211, %v211
    %v219 = vpack.c.b16 %v212, %v212
    %v339 = vunpack.c.l.b16 %v84
    %v340 = vunpack.c.h.b16 %v84
    %v341 = vunpack.c.l.b16 %v85
    %v342 = vunpack.c.h.b16 %v85
    %v343 = vunpack.c.l.b16 %v86
    %v344 = vunpack.c.h.b16 %v86
    %v345 = vunpack.c.l.b16 %v87
    %v346 = vunpack.c.h.b16 %v87
    %v347 = vunpack.c.l.b16 %v88
    %v348 = vunpack.c.h.b16 %v88
    %v349 = vunpack.c.l.b16 %v89
    %v350 = vunpack.c.h.b16 %v89
    %v351 = vunpack.c.l.b16 %v90
    %v352 = vunpack.c.h.b16 %v90
    %v353 = vunpack.c.l.b16 %v91
    %v354 = vunpack.c.h.b16 %v91
    %v355 = vunpack.c.l.b16 %v92
    %v356 = vunpack.c.h.b16 %v92
    %v357 = vunpack.c.l.b16 %v93
    %v358 = vunpack.c.h.b16 %v93
    %v359 = vunpack.c.l.b16 %v94
    %v360 = vunpack.c.h.b16 %v94
    %v361 = vunpack.c.l.b16 %v95
    %v362 = vunpack.c.h.b16 %v95
    %v363 = vunpack.c.l.b16 %v96
    %v364 = vunpack.c.h.b16 %v96
    %v365 = vunpack.c.l.b16 %v97
    %v366 = vunpack.c.h.b16 %v97
    %v367 = vunpack.c.l.b16 %v98
    %v368 = vunpack.c.h.b16 %v98
    %v369 = vunpack.c.l.b16 %v99
    %v370 = vunpack.c.h.b16 %v99
    %v371 = vunpack.c.l.b16 %v100
    %v372 = vunpack.c.h.b16 %v100
    %v373 = vunpack.c.l.b16 %v101
    %v374 = vunpack.c.h.b16 %v101
    %v375 = vunpack.c.l.b16 %v102
    %v376 = vunpack.c.h.b16 %v102
    %v377 = vunpack.c.l.b16 %v103
    %v378 = vunpack.c.h.b16 %v103
    %v379 = vunpack.c.l.b16 %v104
    %v380 = vunpack.c.h.b16 %v104
    %v381 = vunpack.c.l.b16 %v105
    %v382 = vunpack.c.h.b16 %v105
    %v383 = vunpack.c.l.b16 %v106
    %v384 = vunpack.c.h.b16 %v106
    %v385 = vunpack.c.l.b16 %v107
    %v386 = vunpack.c.h.b16 %v107
    %v387 = vunpack.c.l.b16 %v108
    %v388 = vunpack.c.h.b16 %v108
    %v389 = vunpack.c.l.b16 %v109
    %v390 = vunpack.c.h.b16 %v109
    %v391 = vunpack.c.l.b16 %v110
    %v392 = vunpack.c.h.b16 %v110
    %v393 = vunpack.c.l.b16 %v111
    %v394 = vunpack.c.h.b16 %v111
    %v395 = vunpack.c.l.b16 %v112
    %v396 = vunpack.c.h.b16 %v112
    %v397 = vunpack.c.l.b16 %v113
    %v398 = vunpack.c.h.b16 %v113
    %v399 = vunpack.c.l.b16 %v114
    %v400 = vunpack.c.h.b16 %v114
    %v401 = vunpack.c.l.b16 %v115
    %v402 = vunpack.c.h.b16 %v115
    %v403 = vunpack.c.l.b16 %v116
    %v404 = vunpack.c.h.b16 %v116
    %v405 = vunpack.c.l.b16 %v117
    %v406 = vunpack.c.h.b16 %v117
    %v407 = vunpack.c.l.b16 %v118
    %v408 = vunpack.c.h.b16 %v118
    %v409 = vunpack.c.l.b16 %v119
    %v410 = vunpack.c.h.b16 %v119
    %v411 = vunpack.c.l.b16 %v120
    %v412 = vunpack.c.h.b16 %v120
    %v413 = vunpack.c.l.b16 %v121
    %v414 = vunpack.c.h.b16 %v121
    %v415 = vunpack.c.l.b16 %v122
    %v416 = vunpack.c.h.b16 %v122
    %v417 = vunpack.c.l.b16 %v123
    %v418 = vunpack.c.h.b16 %v123
    %v419 = vunpack.c.l.b16 %v124
    %v420 = vunpack.c.h.b16 %v124
    %v421 = vunpack.c.l.b16 %v125
    %v422 = vunpack.c.h.b16 %v125
    %v423 = vunpack.c.l.b16 %v126
    %v424 = vunpack.c.h.b16 %v126
    %v425 = vunpack.c.l.b16 %v127
    %v426 = vunpack.c.h.b16 %v127
    %v427 = vunpack.c.l.b16 %v128
    %v428 = vunpack.c.h.b16 %v128
    %v429 = vunpack.c.l.b16 %v129
    %v430 = vunpack.c.h.b16 %v129
    %v431 = vunpack.c.l.b16 %v130
    %v432 = vunpack.c.h.b16 %v130
    %v433 = vunpack.c.l.b16 %v131
    %v434 = vunpack.c.h.b16 %v131
    %v435 = vunpack.c.l.b16 %v132
    %v436 = vunpack.c.h.b16 %v132
    %v437 = vunpack.c.l.b16 %v133
    %v438 = vunpack.c.h.b16 %v133
    %v439 = vunpack.c.l.b16 %v134
    %v440 = vunpack.c.h.b16 %v134
    %v441 = vunpack.c.l.b16 %v135
    %v442 = vunpack.c.h.b16 %v135
    %v443 = vunpack.c.l.b16 %v136
    %v444 = vunpack.c.h.b16 %v136
    %v445 = vunpack.c.l.b16 %v137
    %v446 = vunpack.c.h.b16 %v137
    %v447 = vunpack.c.l.b16 %v138
    %v448 = vunpack.c.h.b16 %v138
    %v449 = vunpack.c.l.b16 %v139
    %v450 = vunpack.c.h.b16 %v139
    %v451 = vunpack.c.l.b16 %v140
    %v452 = vunpack.c.h.b16 %v140
    %v453 = vunpack.c.l.b16 %v141
    %v454 = vunpack.c.h.b16 %v141
    %v455 = vunpack.c.l.b16 %v142
    %v456 = vunpack.c.h.b16 %v142
    %v457 = vunpack.c.l.b16 %v143
    %v458 = vunpack.c.h.b16 %v143
    %v459 = vunpack.c.l.b16 %v144
    %v460 = vunpack.c.h.b16 %v144
    %v461 = vunpack.c.l.b16 %v145
    %v462 = vunpack.c.h.b16 %v145
    %v463 = vunpack.c.l.b16 %v146
    %v464 = vunpack.c.h.b16 %v146
    %v465 = vunpack.c.l.b16 %v147
    %v466 = vunpack.c.h.b16 %v147
    %v467 = vunpack.c.l.b16 %v148
    %v468 = vunpack.c.h.b16 %v148
    %v469 = vunpack.c.l.b16 %v149
    %v470 = vunpack.c.h.b16 %v149
    %v471 = vunpack.c.l.b16 %v150
    %v472 = vunpack.c.h.b16 %v150
    %v473 = vunpack.c.l.b16 %v151
    %v474 = vunpack.c.h.b16 %v151
    %v475 = vunpack.c.l.b16 %v152
    %v476 = vunpack.c.h.b16 %v152
    %v477 = vunpack.c.l.b16 %v153
    %v478 = vunpack.c.h.b16 %v153
    %v479 = vunpack.c.l.b16 %v154
    %v480 = vunpack.c.h.b16 %v154
    %v481 = vunpack.c.l.b16 %v155
    %v482 = vunpack.c.h.b16 %v155
    %v483 = vunpack.c.l.b16 %v156
    %v484 = vunpack.c.h.b16 %v156
    %v485 = vunpack.c.l.b16 %v157
    %v486 = vunpack.c.h.b16 %v157
    %v487 = vunpack.c.l.b16 %v158
    %v488 = vunpack.c.h.b16 %v158
    %v489 = vunpack.c.l.b16 %v159
    %v490 = vunpack.c.h.b16 %v159
    %v491 = vunpack.c.l.b16 %v160
    %v492 = vunpack.c.h.b16 %v160
    %v493 = vunpack.c.l.b16 %v161
    %v494 = vunpack.c.h.b16 %v161
    %v495 = vunpack.c.l.b16 %v162
    %v496 = vunpack.c.h.b16 %v162
    %v497 = vunpack.c.l.b16 %v163
    %v498 = vunpack.c.h.b16 %v163
    %v499 = vunpack.c.l.b16 %v164
    %v500 = vunpack.c.h.b16 %v164
    %v501 = vunpack.c.l.b16 %v165
    %v502 = vunpack.c.h.b16 %v165
    %v503 = vunpack.c.l.b16 %v166
    %v504 = vunpack.c.h.b16 %v166
    %v505 = vunpack.c.l.b16 %v167
    %v506 = vunpack.c.h.b16 %v167
    %v507 = vunpack.c.l.b16 %v168
    %v508 = vunpack.c.h.b16 %v168
    %v509 = vunpack.c.l.b16 %v169
    %v510 = vunpack.c.h.b16 %v169
    %v511 = vunpack.c.l.b16 %v170
    %v512 = vunpack.c.h.b16 %v170
    %v513 = vunpack.c.l.b16 %v171
    %v514 = vunpack.c.h.b16 %v171
    %v515 = vunpack.c.l.b16 %v172
    %v516 = vunpack.c.h.b16 %v172
    %v517 = vunpack.c.l.b16 %v173
    %v518 = vunpack.c.h.b16 %v173
    %v519 = vunpack.c.l.b16 %v174
    %v520 = vunpack.c.h.b16 %v174
    %v521 = vunpack.c.l.b16 %v175
    %v522 = vunpack.c.h.b16 %v175
    %v523 = vunpack.c.l.b16 %v176
    %v524 = vunpack.c.h.b16 %v176
    %v525 = vunpack.c.l.b16 %v177
    %v526 = vunpack.c.h.b16 %v177
    %v527 = vunpack.c.l.b16 %v178
    %v528 = vunpack.c.h.b16 %v178
    %v529 = vunpack.c.l.b16 %v179
    %v530 = vunpack.c.h.b16 %v179
    %v531 = vunpack.c.l.b16 %v180
    %v532 = vunpack.c.h.b16 %v180
    %v533 = vunpack.c.l.b16 %v181
    %v534 = vunpack.c.h.b16 %v181
    %v535 = vunpack.c.l.b16 %v182
    %v536 = vunpack.c.h.b16 %v182
    %v537 = vunpack.c.l.b16 %v183
    %v538 = vunpack.c.h.b16 %v183
    %v539 = vunpack.c.l.b16 %v184
    %v540 = vunpack.c.h.b16 %v184
    %v541 = vunpack.c.l.b16 %v185
    %v542 = vunpack.c.h.b16 %v185
    %v543 = vunpack.c.l.b16 %v186
    %v544 = vunpack.c.h.b16 %v186
    %v545 = vunpack.c.l.b16 %v187
    %v546 = vunpack.c.h.b16 %v187
    %v547 = vunpack.c.l.b16 %v188
    %v548 = vunpack.c.h.b16 %v188
    %v549 = vunpack.c.l.b16 %v189
    %v550 = vunpack.c.h.b16 %v189
    %v551 = vunpack.c.l.b16 %v190
    %v552 = vunpack.c.h.b16 %v190
    %v553 = vunpack.c.l.b16 %v191
    %v554 = vunpack.c.h.b16 %v191
    %v555 = vunpack.c.l.b16 %v192
    %v556 = vunpack.c.h.b16 %v192
    %v557 = vunpack.c.l.b16 %v193
    %v558 = vunpack.c.h.b16 %v193
    %v559 = vunpack.c.l.b16 %v194
    %v560 = vunpack.c.h.b16 %v194
    %v561 = vunpack.c.l.b16 %v195
    %v562 = vunpack.c.h.b16 %v195
    %v563 = vpack.c.b16 %v341, %v339
    %v564 = vpack.c.b16 %v342, %v340
    %v565 = vpack.c.b16 %v345, %v343
    %v566 = vpack.c.b16 %v346, %v344
    %v567 = vpack.c.b16 %v349, %v347
    %v568 = vpack.c.b16 %v350, %v348
    %v569 = vpack.c.b16 %v353, %v351
    %v570 = vpack.c.b16 %v354, %v352
    %v571 = vpack.c.b16 %v357, %v355
    %v572 = vpack.c.b16 %v358, %v356
    %v573 = vpack.c.b16 %v361, %v359
    %v574 = vpack.c.b16 %v362, %v360
    %v575 = vpack.c.b16 %v365, %v363
    %v576 = vpack.c.b16 %v366, %v364
    %v577 = vpack.c.b16 %v369, %v367
    %v578 = vpack.c.b16 %v370, %v368
    %v579 = vpack.c.b16 %v373, %v371
    %v580 = vpack.c.b16 %v374, %v372
    %v581 = vpack.c.b16 %v377, %v375
    %v582 = vpack.c.b16 %v378, %v376
    %v583 = vpack.c.b16 %v381, %v379
    %v584 = vpack.c.b16 %v382, %v380
    %v585 = vpack.c.b16 %v385, %v383
    %v586 = vpack.c.b16 %v386, %v384
    %v587 = vpack.c.b16 %v389, %v387
    %v588 = vpack.c.b16 %v390, %v388
    %v589 = vpack.c.b16 %v393, %v391
    %v590 = vpack.c.b16 %v394, %v392
    %v591 = vpack.c.b16 %v397, %v395
    %v592 = vpack.c.b16 %v398, %v396
    %v593 = vpack.c.b16 %v401, %v399
    %v594 = vpack.c.b16 %v402, %v400
    %v595 = vpack.c.b16 %v405, %v403
    %v596 = vpack.c.b16 %v406, %v404
    %v597 = vpack.c.b16 %v409, %v407
    %v598 = vpack.c.b16 %v410, %v408
    %v599 = vpack.c.b16 %v413, %v411
    %v600 = vpack.c.b16 %v414, %v412
    %v601 = vpack.c.b16 %v417, %v415
    %v602 = vpack.c.b16 %v418, %v416
    %v603 = vpack.c.b16 %v421, %v419
    %v604 = vpack.c.b16 %v422, %v420
    %v605 = vpack.c.b16 %v425, %v423
    %v606 = vpack.c.b16 %v426, %v424
    %v607 = vpack.c.b16 %v429, %v427
    %v608 = vpack.c.b16 %v430, %v428
    %v609 = vpack.c.b16 %v433, %v431
    %v610 = vpack.c.b16 %v434, %v432
    %v611 = vpack.c.b16 %v437, %v435
    %v612 = vpack.c.b16 %v438, %v436
    %v613 = vpack.c.b16 %v441, %v439
    %v614 = vpack.c.b16 %v442, %v440
    %v615 = vpack.c.b16 %v445, %v443
    %v616 = vpack.c.b16 %v446, %v444
    %v617 = vpack.c.b16 %v449, %v447
    %v618 = vpack.c.b16 %v450, %v448
    %v619 = vpack.c.b16 %v453, %v451
    %v620 = vpack.c.b16 %v454, %v452
    %v621 = vpack.c.b16 %v457, %v455
    %v622 = vpack.c.b16 %v458, %v456
    %v623 = vpack.c.b16 %v461, %v459
    %v624 = vpack.c.b16 %v462, %v460
    %v625 = vpack.c.b16 %v465, %v463
    %v626 = vpack.c.b16 %v466, %v464
    %v627 = vpack.c.b16 %v469, %v467
    %v628 = vpack.c.b16 %v470, %v468
    %v629 = vpack.c.b16 %v473, %v471
    %v630 = vpack.c.b16 %v474, %v472
    %v631 = vpack.c.b16 %v477, %v475
    %v632 = vpack.c.b16 %v478, %v476
    %v633 = vpack.c.b16 %v481, %v479
    %v634 = vpack.c.b16 %v482, %v480
    %v635 = vpack.c.b16 %v485, %v483
    %v636 = vpack.c.b16 %v486, %v484
    %v637 = vpack.c.b16 %v489, %v487
    %v638 = vpack.c.b16 %v490, %v488
    %v639 = vpack.c.b16 %v493, %v491
    %v640 = vpack.c.b16 %v494, %v492
    %v641 = vpack.c.b16 %v497, %v495
    %v642 = vpack.c.b16 %v498, %v496
    %v643 = vpack.c.b16 %v501, %v499
    %v644 = vpack.c.b16 %v502, %v500
    %v645 = vpack.c.b16 %v505, %v503
    %v646 = vpack.c.b16 %v506, %v504
    %v647 = vpack.c.b16 %v509, %v507
    %v648 = vpack.c.b16 %v510, %v508
    %v649 = vpack.c.b16 %v513, %v511
    %v650 = vpack.c.b16 %v514, %v512
    %v651 = vpack.c.b16 %v517, %v515
    %v652 = vpack.c.b16 %v518, %v516
    %v653 = vpack.c.b16 %v521, %v519
    %v654 = vpack.c.b16 %v522, %v520
    %v655 = vpack.c.b16 %v525, %v523
    %v656 = vpack.c.b16 %v526, %v524
    %v657 = vpack.c.b16 %v529, %v527
    %v658 = vpack.c.b16 %v530, %v528
    %v659 = vpack.c.b16 %v533, %v531
    %v660 = vpack.c.b16 %v534, %v532
    %v661 = vpack.c.b16 %v537, %v535
    %v662 = vpack.c.b16 %v538, %v536
    %v663 = vpack.c.b16 %v541, %v539
    %v664 = vpack.c.b16 %v542, %v540
    %v665 = vpack.c.b16 %v545, %v543
    %v666 = vpack.c.b16 %v546, %v544
    %v667 = vpack.c.b16 %v549, %v547
    %v668 = vpack.c.b16 %v550, %v548
    %v669 = vpack.c.b16 %v553, %v551
    %v670 = vpack.c.b16 %v554, %v552
    %v671 = vpack.c.b16 %v557, %v555
    %v672 = vpack.c.b16 %v558, %v556
    %v673 = vpack.c.b16 %v561, %v559
    %v674 = vpack.c.b16 %v562, %v560
    %787 = vmatpush.bf16.msra.mxu0 %v577
    %788 = vmatpush.bf16.msra.mxu0 %v575
    %789 = vmatpush.bf16.msra.mxu0 %v573
    %790 = vmatpush.bf16.msra.mxu0 %v571
    %791 = vmatpush.bf16.msra.mxu0 %v569
    %792 = vmatpush.bf16.msra.mxu0 %v567
    %793 = vmatpush.bf16.msra.mxu0 %v565
    %794 = vmatpush.bf16.msra.mxu0 %v563
    %795 = vmatmul.bf16.gmra.mxu0 %v213
    %v796 = vpop.f32.mrf.mxu0
    %v797 = vadd.f32 %v198, %v796
    %v798 = vpop.f32.mrf.mxu0
    %799 = vdwg.mxu0
    %800 = vmatpush.bf16.msra.mxu0 %v593
    %801 = vmatpush.bf16.msra.mxu0 %v591
    %802 = vmatpush.bf16.msra.mxu0 %v589
    %803 = vmatpush.bf16.msra.mxu0 %v587
    %804 = vmatpush.bf16.msra.mxu0 %v585
    %805 = vmatpush.bf16.msra.mxu0 %v583
    %806 = vmatpush.bf16.msra.mxu0 %v581
    %807 = vmatpush.bf16.msra.mxu0 %v579
    %808 = vmatmul.bf16.gmra.mxu0 %v214
    %v809 = vpop.f32.mrf.mxu0
    %v810 = vadd.f32 %v797, %v809
    %v811 = vpop.f32.mrf.mxu0
    %812 = vdwg.mxu0
    %813 = vmatpush.bf16.msra.mxu0 %v609
    %814 = vmatpush.bf16.msra.mxu0 %v607
    %815 = vmatpush.bf16.msra.mxu0 %v605
    %816 = vmatpush.bf16.msra.mxu0 %v603
    %817 = vmatpush.bf16.msra.mxu0 %v601
    %818 = vmatpush.bf16.msra.mxu0 %v599
    %819 = vmatpush.bf16.msra.mxu0 %v597
    %820 = vmatpush.bf16.msra.mxu0 %v595
    %821 = vmatmul.bf16.gmra.mxu0 %v215
    %v822 = vpop.f32.mrf.mxu0
    %v823 = vadd.f32 %v810, %v822
    %v824 = vpop.f32.mrf.mxu0
    %825 = vdwg.mxu0
    %826 = vmatpush.bf16.msra.mxu0 %v625
    %827 = vmatpush.bf16.msra.mxu0 %v623
    %828 = vmatpush.bf16.msra.mxu0 %v621
    %829 = vmatpush.bf16.msra.mxu0 %v619
    %830 = vmatpush.bf16.msra.mxu0 %v617
    %831 = vmatpush.bf16.msra.mxu0 %v615
    %832 = vmatpush.bf16.msra.mxu0 %v613
    %833 = vmatpush.bf16.msra.mxu0 %v611
    %834 = vmatmul.bf16.gmra.mxu0 %v216
    %v835 = vpop.f32.mrf.mxu0
    %v836 = vadd.f32 %v823, %v835
    %v837 = vpop.f32.mrf.mxu0
    %838 = vdwg.mxu0
    %839 = vmatpush.bf16.msra.mxu0 %v641
    %840 = vmatpush.bf16.msra.mxu0 %v639
    %841 = vmatpush.bf16.msra.mxu0 %v637
    %842 = vmatpush.bf16.msra.mxu0 %v635
    %843 = vmatpush.bf16.msra.mxu0 %v633
    %844 = vmatpush.bf16.msra.mxu0 %v631
    %845 = vmatpush.bf16.msra.mxu0 %v629
    %846 = vmatpush.bf16.msra.mxu0 %v627
    %847 = vmatmul.bf16.gmra.mxu0 %v217
    %v848 = vpop.f32.mrf.mxu0
    %v849 = vadd.f32 %v836, %v848
    %v850 = vpop.f32.mrf.mxu0
    %851 = vdwg.mxu0
    %852 = vmatpush.bf16.msra.mxu0 %v657
    %853 = vmatpush.bf16.msra.mxu0 %v655
    %854 = vmatpush.bf16.msra.mxu0 %v653
    %855 = vmatpush.bf16.msra.mxu0 %v651
    %856 = vmatpush.bf16.msra.mxu0 %v649
    %857 = vmatpush.bf16.msra.mxu0 %v647
    %858 = vmatpush.bf16.msra.mxu0 %v645
    %859 = vmatpush.bf16.msra.mxu0 %v643
    %860 = vmatmul.bf16.gmra.mxu0 %v218
    %v861 = vpop.f32.mrf.mxu0
    %v862 = vadd.f32 %v849, %v861
    %v863 = vpop.f32.mrf.mxu0
    %864 = vdwg.mxu0
    %865 = vmatpush.bf16.msra.mxu0 %v673
    %866 = vmatpush.bf16.msra.mxu0 %v671
    %867 = vmatpush.bf16.msra.mxu0 %v669
    %868 = vmatpush.bf16.msra.mxu0 %v667
    %869 = vmatpush.bf16.msra.mxu0 %v665
    %870 = vmatpush.bf16.msra.mxu0 %v663
    %871 = vmatpush.bf16.msra.mxu0 %v661
    %872 = vmatpush.bf16.msra.mxu0 %v659
    %873 = vmatmul.bf16.gmra.mxu0 %v219
    %v874 = vpop.f32.mrf.mxu0
    %v875 = vadd.f32 %v862, %v874
    %v876 = vpop.f32.mrf.mxu0
    %877 = vdwg.mxu0
    %878 = vmatpush.bf16.msra.mxu0 %v578
    %879 = vmatpush.bf16.msra.mxu0 %v576
    %880 = vmatpush.bf16.msra.mxu0 %v574
    %881 = vmatpush.bf16.msra.mxu0 %v572
    %882 = vmatpush.bf16.msra.mxu0 %v570
    %883 = vmatpush.bf16.msra.mxu0 %v568
    %884 = vmatpush.bf16.msra.mxu0 %v566
    %885 = vmatpush.bf16.msra.mxu0 %v564
    %886 = vmatmul.bf16.gmra.mxu0 %v213
    %v887 = vpop.f32.mrf.mxu0
    %v888 = vadd.f32 %v199, %v887
    %v889 = vpop.f32.mrf.mxu0
    %890 = vdwg.mxu0
    %891 = vmatpush.bf16.msra.mxu0 %v594
    %892 = vmatpush.bf16.msra.mxu0 %v592
    %893 = vmatpush.bf16.msra.mxu0 %v590
    %894 = vmatpush.bf16.msra.mxu0 %v588
    %895 = vmatpush.bf16.msra.mxu0 %v586
    %896 = vmatpush.bf16.msra.mxu0 %v584
    %897 = vmatpush.bf16.msra.mxu0 %v582
    %898 = vmatpush.bf16.msra.mxu0 %v580
    %899 = vmatmul.bf16.gmra.mxu0 %v214
    %v900 = vpop.f32.mrf.mxu0
    %v901 = vadd.f32 %v888, %v900
    %v902 = vpop.f32.mrf.mxu0
    %903 = vdwg.mxu0
    %904 = vmatpush.bf16.msra.mxu0 %v610
    %905 = vmatpush.bf16.msra.mxu0 %v608
    %906 = vmatpush.bf16.msra.mxu0 %v606
    %907 = vmatpush.bf16.msra.mxu0 %v604
    %908 = vmatpush.bf16.msra.mxu0 %v602
    %909 = vmatpush.bf16.msra.mxu0 %v600
    %910 = vmatpush.bf16.msra.mxu0 %v598
    %911 = vmatpush.bf16.msra.mxu0 %v596
    %912 = vmatmul.bf16.gmra.mxu0 %v215
    %v913 = vpop.f32.mrf.mxu0
    %v914 = vadd.f32 %v901, %v913
    %v915 = vpop.f32.mrf.mxu0
    %916 = vdwg.mxu0
    %917 = vmatpush.bf16.msra.mxu0 %v626
    %918 = vmatpush.bf16.msra.mxu0 %v624
    %919 = vmatpush.bf16.msra.mxu0 %v622
    %920 = vmatpush.bf16.msra.mxu0 %v620
    %921 = vmatpush.bf16.msra.mxu0 %v618
    %922 = vmatpush.bf16.msra.mxu0 %v616
    %923 = vmatpush.bf16.msra.mxu0 %v614
    %924 = vmatpush.bf16.msra.mxu0 %v612
    %925 = vmatmul.bf16.gmra.mxu0 %v216
    %v926 = vpop.f32.mrf.mxu0
    %v927 = vadd.f32 %v914, %v926
    %v928 = vpop.f32.mrf.mxu0
    %929 = vdwg.mxu0
    %930 = vmatpush.bf16.msra.mxu0 %v642
    %931 = vmatpush.bf16.msra.mxu0 %v640
    %932 = vmatpush.bf16.msra.mxu0 %v638
    %933 = vmatpush.bf16.msra.mxu0 %v636
    %934 = vmatpush.bf16.msra.mxu0 %v634
    %935 = vmatpush.bf16.msra.mxu0 %v632
    %936 = vmatpush.bf16.msra.mxu0 %v630
    %937 = vmatpush.bf16.msra.mxu0 %v628
    %938 = vmatmul.bf16.gmra.mxu0 %v217
    %v939 = vpop.f32.mrf.mxu0
    %v940 = vadd.f32 %v927, %v939
    %v941 = vpop.f32.mrf.mxu0
    %942 = vdwg.mxu0
    %943 = vmatpush.bf16.msra.mxu0 %v658
    %944 = vmatpush.bf16.msra.mxu0 %v656
    %945 = vmatpush.bf16.msra.mxu0 %v654
    %946 = vmatpush.bf16.msra.mxu0 %v652
    %947 = vmatpush.bf16.msra.mxu0 %v650
    %948 = vmatpush.bf16.msra.mxu0 %v648
    %949 = vmatpush.bf16.msra.mxu0 %v646
    %950 = vmatpush.bf16.msra.mxu0 %v644
    %951 = vmatmul.bf16.gmra.mxu0 %v218
    %v952 = vpop.f32.mrf.mxu0
    %v953 = vadd.f32 %v940, %v952
    %v954 = vpop.f32.mrf.mxu0
    %955 = vdwg.mxu0
    %956 = vmatpush.bf16.msra.mxu0 %v674
    %957 = vmatpush.bf16.msra.mxu0 %v672
    %958 = vmatpush.bf16.msra.mxu0 %v670
    %959 = vmatpush.bf16.msra.mxu0 %v668
    %960 = vmatpush.bf16.msra.mxu0 %v666
    %961 = vmatpush.bf16.msra.mxu0 %v664
    %962 = vmatpush.bf16.msra.mxu0 %v662
    %963 = vmatpush.bf16.msra.mxu0 %v660
    %964 = vmatmul.bf16.gmra.mxu0 %v219
    %v965 = vpop.f32.mrf.mxu0
    %v966 = vadd.f32 %v953, %v965
    %v967 = vpop.f32.mrf.mxu0
    %968 = vdwg.mxu0
    %v969 = vmax.f32 %v875, 0.0
    %v970 = vmax.f32 %v966, 0.0
    %v971 = vpack.c.bf16 %v969, %v969
    %v972 = vpack.c.bf16 %v970, %v970
    %v973 = vld [vmem:[#allocation8] sm:$0xf]
    %v974 = vld [vmem:[#allocation8 + $0x4] sm:$0xf]
    %v975 = vld [vmem:[#allocation8 + $0x8] sm:$0xf]
    %v976 = vld [vmem:[#allocation8 + $0xc] sm:$0xf]
    %v977 = vld [vmem:[#allocation8 + $0x10] sm:$0xf]
    %v978 = vld [vmem:[#allocation8 + $0x14] sm:$0xf]
    %v979 = vld [vmem:[#allocation8 + $0x18] sm:$0xf]
    %v980 = vld [vmem:[#allocation8 + $0x1c] sm:$0xf]
    %v981 = vld [vmem:[#allocation8 + $0x20] sm:$0xf]
    %v982 = vld [vmem:[#allocation8 + $0x24] sm:$0xf]
    %v983 = vld [vmem:[#allocation8 + $0x28] sm:$0xf]
    %v984 = vld [vmem:[#allocation8 + $0x2c] sm:$0xf]
    %v985 = vld [vmem:[#allocation8 + $0x30] sm:$0xf]
    %v986 = vld [vmem:[#allocation8 + $0x34] sm:$0xf]
    %v987 = vld [vmem:[#allocation8 + $0x38] sm:$0xf]
    %v988 = vld [vmem:[#allocation8 + $0x3c] sm:$0xf]
    %v989 = vld [vmem:[#allocation8 + $0x40] sm:$0xf]
    %v990 = vld [vmem:[#allocation8 + $0x44] sm:$0xf]
    %v991 = vld [vmem:[#allocation8 + $0x48] sm:$0xf]
    %v992 = vld [vmem:[#allocation8 + $0x4c] sm:$0xf]
    %v993 = vld [vmem:[#allocation8 + $0x50] sm:$0xf]
    %v994 = vld [vmem:[#allocation8 + $0x54] sm:$0xf]
    %v995 = vld [vmem:[#allocation8 + $0x58] sm:$0xf]
    %v996 = vld [vmem:[#allocation8 + $0x5c] sm:$0xf]
    %v997 = vld [vmem:[#allocation8 + $0x60] sm:$0xf]
    %v998 = vld [vmem:[#allocation8 + $0x64] sm:$0xf]
    %v999 = vld [vmem:[#allocation8 + $0x68] sm:$0xf]
    %v1000 = vld [vmem:[#allocation8 + $0x6c] sm:$0xf]
    %v1001 = vld [vmem:[#allocation8 + $0x70] sm:$0xf]
    %v1002 = vld [vmem:[#allocation8 + $0x74] sm:$0xf]
    %v1003 = vld [vmem:[#allocation8 + $0x78] sm:$0xf]
    %v1004 = vld [vmem:[#allocation8 + $0x7c] sm:$0xf]
    %v1005 = vld [vmem:[%s4] sm:$0x1]
    %v1007 = vperm.slane %v1005, 0
    %v1041 = vunpack.c.l.b16 %v973
    %v1042 = vunpack.c.l.b16 %v974
    %v1043 = vunpack.c.l.b16 %v975
    %v1044 = vunpack.c.l.b16 %v976
    %v1045 = vunpack.c.l.b16 %v977
    %v1046 = vunpack.c.l.b16 %v978
    %v1047 = vunpack.c.l.b16 %v979
    %v1048 = vunpack.c.l.b16 %v980
    %v1049 = vunpack.c.l.b16 %v981
    %v1050 = vunpack.c.l.b16 %v982
    %v1051 = vunpack.c.l.b16 %v983
    %v1052 = vunpack.c.l.b16 %v984
    %v1053 = vunpack.c.l.b16 %v985
    %v1054 = vunpack.c.l.b16 %v986
    %v1055 = vunpack.c.l.b16 %v987
    %v1056 = vunpack.c.l.b16 %v988
    %v1057 = vunpack.c.l.b16 %v989
    %v1058 = vunpack.c.l.b16 %v990
    %v1059 = vunpack.c.l.b16 %v991
    %v1060 = vunpack.c.l.b16 %v992
    %v1061 = vunpack.c.l.b16 %v993
    %v1062 = vunpack.c.l.b16 %v994
    %v1063 = vunpack.c.l.b16 %v995
    %v1064 = vunpack.c.l.b16 %v996
    %v1065 = vunpack.c.l.b16 %v997
    %v1066 = vunpack.c.l.b16 %v998
    %v1067 = vunpack.c.l.b16 %v999
    %v1068 = vunpack.c.l.b16 %v1000
    %v1069 = vunpack.c.l.b16 %v1001
    %v1070 = vunpack.c.l.b16 %v1002
    %v1071 = vunpack.c.l.b16 %v1003
    %v1072 = vunpack.c.l.b16 %v1004
    %v1073 = vpack.c.b16 %v1042, %v1041
    %v1074 = vpack.c.b16 %v1044, %v1043
    %v1075 = vpack.c.b16 %v1046, %v1045
    %v1076 = vpack.c.b16 %v1048, %v1047
    %v1077 = vpack.c.b16 %v1050, %v1049
    %v1078 = vpack.c.b16 %v1052, %v1051
    %v1079 = vpack.c.b16 %v1054, %v1053
    %v1080 = vpack.c.b16 %v1056, %v1055
    %v1081 = vpack.c.b16 %v1058, %v1057
    %v1082 = vpack.c.b16 %v1060, %v1059
    %v1083 = vpack.c.b16 %v1062, %v1061
    %v1084 = vpack.c.b16 %v1064, %v1063
    %v1085 = vpack.c.b16 %v1066, %v1065
    %v1086 = vpack.c.b16 %v1068, %v1067
    %v1087 = vpack.c.b16 %v1070, %v1069
    %v1088 = vpack.c.b16 %v1072, %v1071
    %1105 = vmatpush.bf16.msra.mxu0 %v1080
    %1106 = vmatpush.bf16.msra.mxu0 %v1079
    %1107 = vmatpush.bf16.msra.mxu0 %v1078
    %1108 = vmatpush.bf16.msra.mxu0 %v1077
    %1109 = vmatpush.bf16.msra.mxu0 %v1076
    %1110 = vmatpush.bf16.msra.mxu0 %v1075
    %1111 = vmatpush.bf16.msra.mxu0 %v1074
    %1112 = vmatpush.bf16.msra.mxu0 %v1073
    %1113 = vmatmul.bf16.gmra.mxu0 %v971
    %v1114 = vpop.f32.mrf.mxu0
    %v1115 = vadd.f32 %v1007, %v1114
    %v1116 = vpop.f32.mrf.mxu0
    %1117 = vdwg.mxu0
    %1118 = vmatpush.bf16.msra.mxu0 %v1088
    %1119 = vmatpush.bf16.msra.mxu0 %v1087
    %1120 = vmatpush.bf16.msra.mxu0 %v1086
    %1121 = vmatpush.bf16.msra.mxu0 %v1085
    %1122 = vmatpush.bf16.msra.mxu0 %v1084
    %1123 = vmatpush.bf16.msra.mxu0 %v1083
    %1124 = vmatpush.bf16.msra.mxu0 %v1082
    %1125 = vmatpush.bf16.msra.mxu0 %v1081
    %1126 = vmatmul.bf16.gmra.mxu0 %v972
    %v1127 = vpop.f32.mrf.mxu0
    %v1128 = vadd.f32 %v1115, %v1127
    %v1129 = vpop.f32.mrf.mxu0
    %1130 = vdwg.mxu0
    %1131 = vst [vmem:[#allocation10] sm:$0xff] %v1128
    // Predicated region
    $region38: #{tpu_custom_call.1} parent=1 // pred_check
      _
    $region39: #{tpu_custom_call.1} parent=1 // pred_check_branch
      %1133 = sbr.rel (0) target = $region41
    $region40: #{tpu_custom_call.1} parent=1 // pred_region
      %1135 = vsyncadd [#allocation4], 0
      %s1137 = sshll.u32 [#allocation10], 4
      %s1138 = int_to_ptr.vmem [resolvable:$true] %s1137
      %s1139 = sshll.u32 %s5, 4
      %s1140 = int_to_ptr.hbm [resolvable:$true] %s1139
      %1142 = dma.vmem_to_hbm [thread:$0]  %s1138, 128, %s1140, [#allocation4]
    $region41: #{tpu_custom_call.1} parent=1 // pred_fallthru
      _
    // Predicated region
    $region42: #{tpu_custom_call.1} parent=1 // pred_check
      _
    $region43: #{tpu_custom_call.1} parent=1 // pred_check_branch
      %1144 = sbr.rel (0) target = $region45
    $region44: #{tpu_custom_call.1} parent=1 // pred_region
      %1146 = dma.done [#allocation4], 128
    $region45: #{tpu_custom_call.1} parent=1 // pred_fallthru
      _
    %1147 = vsyncpa [#allocation3], 1
    %1148 = vsyncpa [#allocation6], 1
    %1149 = vsyncpa [#allocation9], 1
    %1150 = vsyncpa [#allocation4], 1

</llo_original>
